<compile_context>
chip_gen: v7x
topology: tpu7x:2x2x1
jax: 0.10.0
libtpu: 0.0.40
codegen_flags: <defaults>
</compile_context>

<pallas_src>
import jax
import jax.numpy as jnp
from jax.experimental import pallas as pl
from jax.experimental.pallas import tpu as pltpu


def mlp_kernel(x_ref, w1b1_ref, w2b2_ref, o_ref):
    in_f = x_ref.shape[1]
    hid = w2b2_ref.shape[0] - 1

    # Layer 1: fc1 + ReLU  (MXU matmul, f32 accumulate; bias-add/ReLU on VPU)
    w1 = w1b1_ref[:in_f, :]          # (In, H)
    b1 = w1b1_ref[in_f:, :]          # (1, H) -> broadcasts over batch
    h = jnp.dot(x_ref[...], w1, preferred_element_type=jnp.float32) + b1
    h = jnp.maximum(h, 0.0)

    # Layer 2: fc2 (no activation, no softmax -- matches reference forward)
    w2 = w2b2_ref[:hid, :]           # (H, O)
    b2 = w2b2_ref[hid:, :]           # (1, O)
    y = jnp.dot(h, w2, preferred_element_type=jnp.float32) + b2

    o_ref[...] = y.astype(o_ref.dtype)


def pack_params(w1, b1, w2, b2):
    """One-time parameter prep (at load time, NOT per forward call).

    w1: (H, In), b1: (H,), w2: (O, H), b2: (O,)  -- PyTorch nn.Linear layout.
    Returns packed [W.T ; b] arrays of shape (In+1, H) and (H+1, O).
    """
    w1b1 = jnp.concatenate([w1.T, b1.reshape(1, -1)], axis=0)
    w2b2 = jnp.concatenate([w2.T, b2.reshape(1, -1)], axis=0)
    return w1b1, w2b2


def basic_bp_forward(x, w1b1, w2b2, *, max_block_b=512):
    """x: (B, In); w1b1: (In+1, H); w2b2: (H+1, O) -> (B, O)."""
    B, In = x.shape
    H = w2b2.shape[0] - 1
    O = w2b2.shape[1]

    # Whole batch as one tile when small; otherwise a sublane-aligned tile so
    # the batch axis pipelines / shards across TensorCores cleanly.
    if B <= max_block_b:
        TB = B
    else:
        TB = (max_block_b // 8) * 8
    grid = (pl.cdiv(B, TB),)

    flops = 2 * B * In * H + 2 * B * H * O
    bytes_accessed = 4 * (B * In + (In + 1) * H + (H + 1) * O + B * O)

    return pl.pallas_call(
        mlp_kernel,
        out_shape=jax.ShapeDtypeStruct((B, O), x.dtype),
        grid=grid,
        in_specs=[
            pl.BlockSpec((TB, In), lambda i: (i, 0)),       # batch-tiled activations
            pl.BlockSpec((In + 1, H), lambda i: (0, 0)),    # layer-1 params, VMEM-resident
            pl.BlockSpec((H + 1, O), lambda i: (0, 0)),     # layer-2 params, VMEM-resident
        ],
        out_specs=pl.BlockSpec((TB, O), lambda i: (i, 0)),
        compiler_params=pltpu.CompilerParams(
            dimension_semantics=("parallel",)),
        cost_estimate=pl.CostEstimate(
            flops=flops, transcendentals=0, bytes_accessed=bytes_accessed),
    )(x, w1b1, w2b2)


if __name__ == "__main__":
    # Shapes implied by the module: Linear(input_num, hidden_num), Linear(hidden_num, output_num)
    batch, input_num, hidden_num, output_num = 8, 32, 64, 16

    key = jax.random.PRNGKey(0)
    kx, kw1, kb1, kw2, kb2 = jax.random.split(key, 5)

    x = jax.random.normal(kx, (batch, input_num), dtype=jnp.float32)
    # PyTorch nn.Linear layout: weight (out, in), bias (out,)
    w1 = jax.random.normal(kw1, (hidden_num, input_num), dtype=jnp.float32) * 0.1
    b1 = jax.random.normal(kb1, (hidden_num,), dtype=jnp.float32) * 0.1
    w2 = jax.random.normal(kw2, (output_num, hidden_num), dtype=jnp.float32) * 0.1
    b2 = jax.random.normal(kb2, (output_num,), dtype=jnp.float32) * 0.1

    # Parameter packing happens once, outside the per-call hot path.
    w1b1, w2b2 = pack_params(w1, b1, w2, b2)
    w1b1, w2b2 = jax.block_until_ready((w1b1, w2b2))

    out = basic_bp_forward(x, w1b1, w2b2)
    out = jax.block_until_ready(out)

    # Reference: exactly the PyTorch forward (relu(fc1(x)) -> fc2, no softmax).
    ref = jnp.maximum(x @ w1.T + b1, 0.0) @ w2.T + b2
    assert out.shape == (batch, output_num)
    assert jnp.allclose(out, ref, atol=1e-5, rtol=1e-5)

    print("KERNEL_OK")
</pallas_src>

<mosaic_0001>
module attributes {stable_mosaic.version = 11 : i64} {
  func.func @mlp_kernel(%arg0: i32, %arg1: memref<8x32xf32, #tpu.memory_space<vmem>>, %arg2: memref<33x64xf32, #tpu.memory_space<vmem>>, %arg3: memref<65x16xf32, #tpu.memory_space<vmem>>, %arg4: memref<8x16xf32, #tpu.memory_space<vmem>>) attributes {dimension_semantics = [#tpu.dimension_semantics<parallel>], iteration_bounds = array<i64: 1>, scalar_prefetch = 0 : i64, scratch_operands = 0 : i64, tpu.core_type = #tpu.core_type<tc>, window_params = [{transform_indices = @transform_0, window_bounds = array<i64: 8, 32>}, {pipeline_mode = #tpu.pipeline_mode<synchronous>, transform_indices = @transform_1, window_bounds = array<i64: 33, 64>}, {pipeline_mode = #tpu.pipeline_mode<synchronous>, transform_indices = @transform_2, window_bounds = array<i64: 65, 16>}, {transform_indices = @transform_3, window_bounds = array<i64: 8, 16>}]} {
    %c0 = arith.constant 0 : index
    %c0_0 = arith.constant 0 : index
    %0 = vector.load %arg2[%c0, %c0_0] : memref<33x64xf32, #tpu.memory_space<vmem>>, vector<32x64xf32>
    %c32 = arith.constant 32 : index
    %c0_1 = arith.constant 0 : index
    %1 = vector.load %arg2[%c32, %c0_1] : memref<33x64xf32, #tpu.memory_space<vmem>>, vector<1x64xf32>
    %c0_2 = arith.constant 0 : index
    %c0_3 = arith.constant 0 : index
    %2 = vector.load %arg1[%c0_2, %c0_3] : memref<8x32xf32, #tpu.memory_space<vmem>>, vector<8x32xf32>
    %cst = arith.constant dense<0.000000e+00> : vector<8x64xf32>
    %3 = tpu.matmul %2, %0, %cst {dimension_numbers = #tpu.dot_dimension_numbers<[1], [0], [0], [1], [0, 0, 1, 1], [], []>} : vector<8x32xf32>, vector<32x64xf32>, vector<8x64xf32> -> vector<8x64xf32>
    %4 = vector.broadcast %1 : vector<1x64xf32> to vector<8x64xf32>
    %5 = arith.addf %3, %4 : vector<8x64xf32>
    %cst_4 = arith.constant 0.000000e+00 : f32
    %6 = vector.broadcast %cst_4 : f32 to vector<8x64xf32>
    %7 = arith.maximumf %5, %6 : vector<8x64xf32>
    %c0_5 = arith.constant 0 : index
    %c0_6 = arith.constant 0 : index
    %8 = vector.load %arg3[%c0_5, %c0_6] : memref<65x16xf32, #tpu.memory_space<vmem>>, vector<64x16xf32>
    %c64 = arith.constant 64 : index
    %c0_7 = arith.constant 0 : index
    %9 = vector.load %arg3[%c64, %c0_7] : memref<65x16xf32, #tpu.memory_space<vmem>>, vector<1x16xf32>
    %cst_8 = arith.constant dense<0.000000e+00> : vector<8x16xf32>
    %10 = tpu.matmul %7, %8, %cst_8 {dimension_numbers = #tpu.dot_dimension_numbers<[1], [0], [0], [1], [0, 0, 1, 1], [], []>} : vector<8x64xf32>, vector<64x16xf32>, vector<8x16xf32> -> vector<8x16xf32>
    %11 = vector.broadcast %9 : vector<1x16xf32> to vector<8x16xf32>
    %12 = arith.addf %10, %11 : vector<8x16xf32>
    %c0_9 = arith.constant 0 : index
    %c0_10 = arith.constant 0 : index
    %13 = vector.load %arg4[%c0_9, %c0_10] : memref<8x16xf32, #tpu.memory_space<vmem>>, vector<8x16xf32>
    tpu.vector_store %arg4[%c0_9, %c0_10], %12 {strides = array<i32>} : memref<8x16xf32, #tpu.memory_space<vmem>>, vector<8x16xf32>,
    return
  }
  func.func @transform_0(%arg0: i32) -> (i32, i32) {
    %c0_i32 = arith.constant 0 : i32
    %c0_i32_0 = arith.constant 0 : i32
    return %arg0, %c0_i32 : i32, i32
  }
  func.func @transform_1(%arg0: i32) -> (i32, i32) {
    %c0_i32 = arith.constant 0 : i32
    %c0_i32_0 = arith.constant 0 : i32
    %c0_i32_1 = arith.constant 0 : i32
    return %c0_i32, %c0_i32_0 : i32, i32
  }
  func.func @transform_2(%arg0: i32) -> (i32, i32) {
    %c0_i32 = arith.constant 0 : i32
    %c0_i32_0 = arith.constant 0 : i32
    %c0_i32_1 = arith.constant 0 : i32
    return %c0_i32, %c0_i32_0 : i32, i32
  }
  func.func @transform_3(%arg0: i32) -> (i32, i32) {
    %c0_i32 = arith.constant 0 : i32
    %c0_i32_0 = arith.constant 0 : i32
    return %arg0, %c0_i32 : i32, i32
  }
}

</mosaic_0001>

<llo_original>
// kernel: tpu_custom_call.1
$region0: #{tpu_custom_call.1}
  #allocation0 [shape = 'u32[]', space=smem, size = 0x4, offset = 0x4, fixed_abs, tag = 'smem constant byte address 0x4 - core index']
  #allocation1 [shape = 'u32[144,128]{1,0:T(1,128)}', space=vmem, size = 0x12000, scoped, tag = 'internal scratch']
  %s0 = inlined_call_operand.vmem [shape: f32[8,32], index: 0, kind: input, shape index: {}]
  %s1 = inlined_call_operand.vmem [shape: f32[33,64], index: 1, kind: input, shape index: {}]
  %s2 = inlined_call_operand.vmem [shape: f32[65,16], index: 2, kind: input, shape index: {}]
  %s3 = inlined_call_operand.hbm [shape: f32[8,16], index: 3, kind: output, shape index: {}]
  %s4 = sld [smem:[#allocation0]]
  $region22: #{tpu_custom_call.1} parent=0
    _
  %s6 = ssub.s32 1, %s4
  %s7 = scalar_select 0, %s6, %s4
  $region1: #{tpu_custom_call.1} parent=0
    #allocation2 [shape = 'u8[4096]{0}', space=vmem, size = 0x1000, scoped, tag = 'output window, operand 0, single buffered']
    #allocation3 [shape = 's32[1]{0}', space=sflag, size = 0x4, scoped, tag = 'scoped memory for tpu_custom_call.1']
    %8 = vsyncpa [#allocation3], 0
    // Predicated region
    $region2: #{tpu_custom_call.1} parent=1 // pred_check
      _
    $region3: #{tpu_custom_call.1} parent=1 // pred_check_branch
      %10 = sbr.rel (0) target = $region5
    $region4: #{tpu_custom_call.1} parent=1 // pred_region
      _
    $region5: #{tpu_custom_call.1} parent=1 // pred_fallthru
      _
    // Predicated region
    $region6: #{tpu_custom_call.1} parent=1 // pred_check
      _
    $region7: #{tpu_custom_call.1} parent=1 // pred_check_branch
      %12 = sbr.rel (0) target = $region9
    $region8: #{tpu_custom_call.1} parent=1 // pred_region
      _
    $region9: #{tpu_custom_call.1} parent=1 // pred_fallthru
      _
    // Predicated region
    $region10: #{tpu_custom_call.1} parent=1 // pred_check
      _
    $region11: #{tpu_custom_call.1} parent=1 // pred_check_branch
      %14 = sbr.rel (0) target = $region13
    $region12: #{tpu_custom_call.1} parent=1 // pred_region
      _
    $region13: #{tpu_custom_call.1} parent=1 // pred_fallthru
      _
    %v15 = vld [vmem:[%s1] sm:$0xff]
    %v16 = vld [vmem:[%s1 + $0x8] sm:$0xff]
    %v17 = vld [vmem:[%s1 + $0x10] sm:$0xff]
    %v18 = vld [vmem:[%s1 + $0x18] sm:$0xff]
    %v19 = vld [vmem:[%s1 + $0x20] sm:$0x1]
    %v20 = vld [vmem:[%s0] sm:$0xff]
    %v21 = vlaneseq
    %v22 = vshrl.u32 %v21, 7
    %v23 = vsub.s32 0, %v22
    %v24 = vrot.slane %v19, %v23
    %vm25 = vcmask 261120
    %v27 = vsel %vm25, %v20, 0
    %29 = vmatprep.subr.mxu0 0.0
    %30 = vmatpush1.msra.mxu0 %v15
    %31 = vmatprep.subr.mxu0 0.0
    %32 = vmatpush1.msra.mxu0 %v16
    %33 = vmatprep.subr.mxu0 0.0
    %34 = vmatpush1.msra.mxu0 %v17
    %35 = vmatprep.subr.mxu0 0.0
    %36 = vmatpush1.msra.mxu0 %v18
    %37 = vmatprep.subr.mxu0 0.0
    %38 = vmatpush1.msra.mxu0 0.0
    %39 = vmatprep.subr.mxu0 0.0
    %40 = vmatpush1.msra.mxu0 0.0
    %41 = vmatprep.subr.mxu0 0.0
    %42 = vmatpush1.msra.mxu0 0.0
    %43 = vmatprep.subr.mxu0 0.0
    %44 = vmatpush1.msra.mxu0 0.0
    %45 = vmatprep.subr.mxu0 0.0
    %46 = vmatpush1.msra.mxu0 0.0
    %47 = vmatprep.subr.mxu0 0.0
    %48 = vmatpush1.msra.mxu0 0.0
    %49 = vmatprep.subr.mxu0 0.0
    %50 = vmatpush1.msra.mxu0 0.0
    %51 = vmatprep.subr.mxu0 0.0
    %52 = vmatpush1.msra.mxu0 0.0
    %53 = vmatprep.subr.mxu0 0.0
    %54 = vmatpush1.msra.mxu0 0.0
    %55 = vmatprep.subr.mxu0 0.0
    %56 = vmatpush1.msra.mxu0 0.0
    %57 = vmatprep.subr.mxu0 0.0
    %58 = vmatpush1.msra.mxu0 0.0
    %59 = vmatprep.subr.mxu0 0.0
    %60 = vmatpush1.msra.mxu0 0.0
    %61 = vmatprep.subr.mxu0 0.0
    %62 = vmatpush1.msra.mxu0 0.0
    %63 = vmatprep.subr.mxu0 0.0
    %64 = vmatpush1.msra.mxu0 0.0
    %65 = vmatprep.subr.mxu0 0.0
    %66 = vmatpush1.msra.mxu0 0.0
    %67 = vmatprep.subr.mxu0 0.0
    %68 = vmatpush1.msra.mxu0 0.0
    %69 = vmatprep.subr.mxu0 0.0
    %70 = vmatpush1.msra.mxu0 0.0
    %71 = vmatprep.subr.mxu0 0.0
    %72 = vmatpush1.msra.mxu0 0.0
    %73 = vmatprep.subr.mxu0 0.0
    %74 = vmatpush1.msra.mxu0 0.0
    %75 = vmatprep.subr.mxu0 0.0
    %76 = vmatpush1.msra.mxu0 0.0
    %77 = vmatprep.subr.mxu0 0.0
    %78 = vmatpush1.msra.mxu0 0.0
    %79 = vmatprep.subr.mxu0 0.0
    %80 = vmatpush1.msra.mxu0 0.0
    %81 = vmatprep.subr.mxu0 0.0
    %82 = vmatpush1.msra.mxu0 0.0
    %83 = vmatprep.subr.mxu0 0.0
    %84 = vmatpush1.msra.mxu0 0.0
    %85 = vmatprep.subr.mxu0 0.0
    %86 = vmatpush1.msra.mxu0 0.0
    %87 = vmatprep.subr.mxu0 0.0
    %88 = vmatpush1.msra.mxu0 0.0
    %89 = vmatprep.subr.mxu0 0.0
    %90 = vmatpush1.msra.mxu0 0.0
    %91 = vmatprep.subr.mxu0 0.0
    %92 = vmatpush1.msra.mxu0 0.0
    %93 = vmatprep.mubr.f32.mxu0 0.0
    %94 = vmatmul.mubr.f32.gmra.mrb[0].mxu0 %v27
    %v95 = vpop.f32.mrb[0].mxu0
    %v96 = vadd.f32 %v24, %v95
    %v97 = vpop.f32.mrb[0].mxu0
    %98 = vdwg.mxu0
    %v99 = vmax.f32 %v96, 0.0
    %v100 = vld [vmem:[%s2] sm:$0xff]
    %v101 = vld [vmem:[%s2 + $0x8] sm:$0xff]
    %v102 = vld [vmem:[%s2 + $0x10] sm:$0xff]
    %v103 = vld [vmem:[%s2 + $0x18] sm:$0xff]
    %v104 = vld [vmem:[%s2 + $0x20] sm:$0xff]
    %v105 = vld [vmem:[%s2 + $0x28] sm:$0xff]
    %v106 = vld [vmem:[%s2 + $0x30] sm:$0xff]
    %v107 = vld [vmem:[%s2 + $0x38] sm:$0xff]
    %v108 = vld [vmem:[%s2 + $0x40] sm:$0x1]
    %v109 = vlaneseq
    %v110 = vshrl.u32 %v109, 7
    %v111 = vsub.s32 0, %v110
    %v112 = vrot.slane %v108, %v111
    %vm113 = vcmask 523264
    %v115 = vsel %vm113, %v99, 0
    %117 = vmatprep.subr.mxu0 0.0
    %118 = vmatpush1.msra.mxu0 %v100
    %119 = vmatprep.subr.mxu0 0.0
    %120 = vmatpush1.msra.mxu0 %v101
    %121 = vmatprep.subr.mxu0 0.0
    %122 = vmatpush1.msra.mxu0 %v102
    %123 = vmatprep.subr.mxu0 0.0
    %124 = vmatpush1.msra.mxu0 %v103
    %125 = vmatprep.subr.mxu0 0.0
    %126 = vmatpush1.msra.mxu0 %v104
    %127 = vmatprep.subr.mxu0 0.0
    %128 = vmatpush1.msra.mxu0 %v105
    %129 = vmatprep.subr.mxu0 0.0
    %130 = vmatpush1.msra.mxu0 %v106
    %131 = vmatprep.subr.mxu0 0.0
    %132 = vmatpush1.msra.mxu0 %v107
    %133 = vmatprep.subr.mxu0 0.0
    %134 = vmatpush1.msra.mxu0 0.0
    %135 = vmatprep.subr.mxu0 0.0
    %136 = vmatpush1.msra.mxu0 0.0
    %137 = vmatprep.subr.mxu0 0.0
    %138 = vmatpush1.msra.mxu0 0.0
    %139 = vmatprep.subr.mxu0 0.0
    %140 = vmatpush1.msra.mxu0 0.0
    %141 = vmatprep.subr.mxu0 0.0
    %142 = vmatpush1.msra.mxu0 0.0
    %143 = vmatprep.subr.mxu0 0.0
    %144 = vmatpush1.msra.mxu0 0.0
    %145 = vmatprep.subr.mxu0 0.0
    %146 = vmatpush1.msra.mxu0 0.0
    %147 = vmatprep.subr.mxu0 0.0
    %148 = vmatpush1.msra.mxu0 0.0
    %149 = vmatprep.subr.mxu0 0.0
    %150 = vmatpush1.msra.mxu0 0.0
    %151 = vmatprep.subr.mxu0 0.0
    %152 = vmatpush1.msra.mxu0 0.0
    %153 = vmatprep.subr.mxu0 0.0
    %154 = vmatpush1.msra.mxu0 0.0
    %155 = vmatprep.subr.mxu0 0.0
    %156 = vmatpush1.msra.mxu0 0.0
    %157 = vmatprep.subr.mxu0 0.0
    %158 = vmatpush1.msra.mxu0 0.0
    %159 = vmatprep.subr.mxu0 0.0
    %160 = vmatpush1.msra.mxu0 0.0
    %161 = vmatprep.subr.mxu0 0.0
    %162 = vmatpush1.msra.mxu0 0.0
    %163 = vmatprep.subr.mxu0 0.0
    %164 = vmatpush1.msra.mxu0 0.0
    %165 = vmatprep.subr.mxu0 0.0
    %166 = vmatpush1.msra.mxu0 0.0
    %167 = vmatprep.subr.mxu0 0.0
    %168 = vmatpush1.msra.mxu0 0.0
    %169 = vmatprep.subr.mxu0 0.0
    %170 = vmatpush1.msra.mxu0 0.0
    %171 = vmatprep.subr.mxu0 0.0
    %172 = vmatpush1.msra.mxu0 0.0
    %173 = vmatprep.subr.mxu0 0.0
    %174 = vmatpush1.msra.mxu0 0.0
    %175 = vmatprep.subr.mxu0 0.0
    %176 = vmatpush1.msra.mxu0 0.0
    %177 = vmatprep.subr.mxu0 0.0
    %178 = vmatpush1.msra.mxu0 0.0
    %179 = vmatprep.subr.mxu0 0.0
    %180 = vmatpush1.msra.mxu0 0.0
    %181 = vmatprep.mubr.f32.mxu0 0.0
    %182 = vmatmul.mubr.f32.gmra.mrb[0].mxu0 %v115
    %v183 = vpop.f32.mrb[0].mxu0
    %v184 = vadd.f32 %v112, %v183
    %v185 = vpop.f32.mrb[0].mxu0
    %186 = vdwg.mxu0
    %vm187 = vcmask 130048
    %188 = vst.msk [vmem:[#allocation2] sm:$0xff] %vm187, %v184
    // Predicated region
    $region14: #{tpu_custom_call.1} parent=1 // pred_check
      _
    $region15: #{tpu_custom_call.1} parent=1 // pred_check_branch
      %190 = sbr.rel (0) target = $region17
    $region16: #{tpu_custom_call.1} parent=1 // pred_region
      %s192 = ssub.s32 128, 128
      %193 = vsyncadd [#allocation3], %s192
      %s195 = sshll.u32 [#allocation2], 4
      %s196 = int_to_ptr.vmem [resolvable:$true] %s195
      %198 = dma.vmem_to_hbm [thread:$0]  %s196, 128, %s3, [#allocation3]
    $region17: #{tpu_custom_call.1} parent=1 // pred_fallthru
      _
    // Predicated region
    $region18: #{tpu_custom_call.1} parent=1 // pred_check
      _
    $region19: #{tpu_custom_call.1} parent=1 // pred_check_branch
      %200 = sbr.rel (0) target = $region21
    $region20: #{tpu_custom_call.1} parent=1 // pred_region
      %201 = dma.done [#allocation3], 128
    $region21: #{tpu_custom_call.1} parent=1 // pred_fallthru
      _
    %202 = vsyncpa [#allocation3], 1

</llo_original>
